<compile_context>
chip_gen: v7x
topology: tpu7x:2x2x1
jax: 0.10.0
libtpu: 0.0.40
codegen_flags: <defaults>
</compile_context>

<pallas_src>
import functools

import numpy as np

import jax
import jax.numpy as jnp
from jax.experimental import pallas as pl
from jax.experimental.pallas import tpu as pltpu


def _dilated_block_kernel(x_ref, ss_ref, wb_ref, o_ref, *, H, KH, DH, PH):
    # x_ref:  (MB, KPC)         rows = folded (batch, height); KPC = padded Wp*CIN
    # ss_ref: (2, KPC)          row 0 = BN scale, row 1 = BN shift (0 on pad lanes)
    # wb_ref: (KH*KPC, W*COUT)  fused banded conv weights (kw taps + W shifts folded)
    # o_ref:  (MB, W*COUT)      lane-dense output
    MB = x_ref.shape[0]

    x = x_ref[...]
    # BatchNorm (eval, pre-folded) + ReLU; pad lanes have scale=shift=0.
    h = jnp.maximum(x * ss_ref[0:1, :] + ss_ref[1:2, :], 0.0)       # (MB, KPC)

    # Row index within each batch element (MB is a multiple of H).
    y = jax.lax.broadcasted_iota(jnp.int32, (MB, 1), 0) % H

    # Build the KH row-shifted copies: identity tap free, others on XLU (roll)
    # with a VPU mask for zero fill at the H borders / batch boundaries.
    parts = []
    for kh in range(KH):
        dy = kh * DH - PH
        if dy == 0:
            parts.append(h)
        else:
            shifted = pltpu.roll(h, shift=(-dy) % MB, axis=0)
            valid = jnp.logical_and(y + dy >= 0, y + dy < H)
            parts.append(jnp.where(valid, shifted, 0.0))
    a = jnp.concatenate(parts, axis=1)                              # (MB, KH*KPC)

    # Single deep-K MXU contraction; output is directly lane-dense.
    o_ref[...] = jnp.dot(a, wb_ref[...],
                         preferred_element_type=jnp.float32).astype(o_ref.dtype)


@functools.partial(jax.jit, static_argnames=("dilation", "eps"))
def dilated_conv2d_block(x_nchw, gamma, beta, running_mean, running_var,
                         weight_oihw, *, dilation=(2, 2), eps=1e-5):
    """Forward pass of DilatedConv2DBlock. x_nchw: (N, CIN, H, W) float32."""
    N, CIN, H, W = x_nchw.shape
    COUT, CIN_w, KH, KW = weight_oihw.shape
    assert CIN_w == CIN, "groups=1 only"
    assert KH % 2 == 1 and KW % 2 == 1, (
        "padding=(k-1)//2*d only matches PyTorch 'same' intent for odd kernels")
    DH, DW = dilation
    PH, PW = (KH - 1) // 2 * DH, (KW - 1) // 2 * DW      # PyTorch padding formula
    Wp = W + 2 * PW
    WPC = Wp * CIN
    KPC = ((WPC + 127) // 128) * 128                      # lane-dense K per kernel row
    WC = W * COUT

    # ---- glue: fold BN, build lane-dense operands (layout plumbing only) ----
    scale = gamma * jax.lax.rsqrt(running_var + eps)      # (CIN,)
    shift = beta - running_mean * scale                   # (CIN,)

    # x: NCHW -> NHWC, W-pad, flatten (W,CIN) into lanes, pad lanes to KPC,
    # fold batch into sublanes.
    x = jnp.transpose(x_nchw, (0, 2, 3, 1))
    xw = jnp.pad(x, ((0, 0), (0, 0), (PW, PW), (0, 0))).reshape(N, H, WPC)
    xw = jnp.pad(xw, ((0, 0), (0, 0), (0, KPC - WPC))).reshape(N * H, KPC)

    col_valid = np.zeros((Wp, 1), np.float32)
    col_valid[PW:PW + W] = 1.0                            # zero BN on pad columns
    cv = jnp.asarray(col_valid)
    ss = jnp.stack([(cv * scale[None, :]).reshape(WPC),
                    (cv * shift[None, :]).reshape(WPC)])  # (2, WPC)
    ss = jnp.pad(ss, ((0, 0), (0, KPC - WPC)))            # (2, KPC)

    # Banded weights: wb[kh, xp*CIN+ci, x*COUT+co] = w[kh,kw,ci,co] iff xp==x+kw*DW,
    # then pad each kh block's K to KPC and fuse all kh blocks into one slab.
    w_hwio = jnp.transpose(weight_oihw, (2, 3, 1, 0))     # (KH, KW, CIN, COUT)
    band = np.zeros((KW, Wp, W), np.float32)
    for kw in range(KW):
        for xo in range(W):
            band[kw, xo + kw * DW, xo] = 1.0
    wb = jnp.einsum("kpx,hkio->hpixo", jnp.asarray(band), w_hwio)
    wb = wb.reshape(KH, WPC, WC)
    wb = jnp.pad(wb, ((0, 0), (0, KPC - WPC), (0, 0))).reshape(KH * KPC, WC)

    # Grid: NB "parallel" blocks (2 -> one per v7x TensorCore), folding N//NB
    # batch elements into the sublane dim per step; single-TC chips pay one
    # extra ~0.35us grid step. Fall back to one block when it doesn't divide.
    NB = 2 if (N % 2 == 0 and N >= 2) else 1
    MB = (N // NB) * H
    if MB % 8 != 0:
        NB, MB = 1, N * H

    kernel = functools.partial(_dilated_block_kernel, H=H, KH=KH, DH=DH, PH=PH)
    out = pl.pallas_call(
        kernel,
        out_shape=jax.ShapeDtypeStruct((N * H, WC), jnp.float32),
        grid_spec=pltpu.PrefetchScalarGridSpec(
            num_scalar_prefetch=0,
            grid=(NB,),
            in_specs=[
                pl.BlockSpec((MB, KPC), lambda n: (n, 0)),
                pl.BlockSpec((2, KPC), lambda n: (0, 0)),
                pl.BlockSpec((KH * KPC, WC), lambda n: (0, 0)),
            ],
            out_specs=pl.BlockSpec((MB, WC), lambda n: (n, 0)),
        ),
        compiler_params=pltpu.CompilerParams(
            dimension_semantics=("parallel",)),
    )(xw, ss, wb)

    out = out.reshape(N, H, W, COUT)                      # same element order
    return jnp.transpose(out, (0, 3, 1, 2))               # back to NCHW


def _reference(x_nchw, gamma, beta, mean, var, weight_oihw, dilation, eps):
    # Pure-JAX reference (same NCHW semantics as PyTorch).
    h = (x_nchw - mean[None, :, None, None]) / jnp.sqrt(
        var[None, :, None, None] + eps)
    h = h * gamma[None, :, None, None] + beta[None, :, None, None]
    h = jnp.maximum(h, 0.0)
    KH, KW = weight_oihw.shape[2:]
    DH, DW = dilation
    pad = ((KH - 1) // 2 * DH, (KW - 1) // 2 * DW)
    return jax.lax.conv_general_dilated(
        h, weight_oihw, window_strides=(1, 1),
        padding=((pad[0], pad[0]), (pad[1], pad[1])),
        rhs_dilation=dilation,
        dimension_numbers=("NCHW", "OIHW", "NCHW"))


if __name__ == "__main__":
    key = jax.random.PRNGKey(0)
    N, CIN, H, W = 2, 4, 16, 16
    COUT, KH, KW = 8, 3, 3
    dilation = (2, 2)

    k1, k2, k3, k4, k5, k6 = jax.random.split(key, 6)
    x = jax.random.normal(k1, (N, CIN, H, W), jnp.float32)
    weight = jax.random.normal(k2, (COUT, CIN, KH, KW), jnp.float32) * 0.1
    gamma = 1.0 + 0.1 * jax.random.normal(k3, (CIN,), jnp.float32)
    beta = 0.1 * jax.random.normal(k4, (CIN,), jnp.float32)
    running_mean = 0.1 * jax.random.normal(k5, (CIN,), jnp.float32)
    running_var = jnp.abs(1.0 + 0.1 * jax.random.normal(k6, (CIN,), jnp.float32))

    out = dilated_conv2d_block(x, gamma, beta, running_mean, running_var,
                               weight, dilation=dilation)
    out = jax.block_until_ready(out)

    ref = _reference(x, gamma, beta, running_mean, running_var, weight,
                     dilation, 1e-5)
    assert out.shape == (N, COUT, H, W)
    err = float(jnp.max(jnp.abs(out - ref)))
    assert err < 1e-3, f"mismatch vs reference: {err}"
    print("KERNEL_OK")
</pallas_src>

<mosaic_0001>
module attributes {stable_mosaic.version = 11 : i64} {
  func.func @_dilated_block_kernel(%arg0: i32, %arg1: memref<16x128xf32, #tpu.memory_space<vmem>>, %arg2: memref<2x128xf32, #tpu.memory_space<vmem>>, %arg3: memref<384x128xf32, #tpu.memory_space<vmem>>, %arg4: memref<16x128xf32, #tpu.memory_space<vmem>>) attributes {dimension_semantics = [#tpu.dimension_semantics<parallel>], iteration_bounds = array<i64: 2>, scalar_prefetch = 0 : i64, scratch_operands = 0 : i64, tpu.core_type = #tpu.core_type<tc>, window_params = [{transform_indices = @transform_0, window_bounds = array<i64: 16, 128>}, {pipeline_mode = #tpu.pipeline_mode<synchronous>, transform_indices = @transform_1, window_bounds = array<i64: 2, 128>}, {pipeline_mode = #tpu.pipeline_mode<synchronous>, transform_indices = @transform_2, window_bounds = array<i64: 384, 128>}, {transform_indices = @transform_3, window_bounds = array<i64: 16, 128>}]} {
    %c0 = arith.constant 0 : index
    %c0_0 = arith.constant 0 : index
    %0 = vector.load %arg1[%c0, %c0_0] : memref<16x128xf32, #tpu.memory_space<vmem>>, vector<16x128xf32>
    %c0_1 = arith.constant 0 : index
    %c0_2 = arith.constant 0 : index
    %1 = vector.load %arg2[%c0_1, %c0_2] : memref<2x128xf32, #tpu.memory_space<vmem>>, vector<1x128xf32>
    %2 = vector.broadcast %1 : vector<1x128xf32> to vector<16x128xf32>
    %3 = arith.mulf %0, %2 : vector<16x128xf32>
    %c1 = arith.constant 1 : index
    %c0_3 = arith.constant 0 : index
    %4 = vector.load %arg2[%c1, %c0_3] : memref<2x128xf32, #tpu.memory_space<vmem>>, vector<1x128xf32>
    %5 = vector.broadcast %4 : vector<1x128xf32> to vector<16x128xf32>
    %6 = arith.addf %3, %5 : vector<16x128xf32>
    %cst = arith.constant 0.000000e+00 : f32
    %7 = vector.broadcast %cst : f32 to vector<16x128xf32>
    %8 = arith.maximumf %6, %7 : vector<16x128xf32>
    %9 = tpu.iota {dimensions = array<i32: 0>} : vector<16x1xi32>
    %c16_i32 = arith.constant 16 : i32
    %c0_i32 = arith.constant 0 : i32
    %10 = arith.cmpi eq, %c16_i32, %c0_i32 : i32
    %c1_i32 = arith.constant 1 : i32
    %11 = arith.select %10, %c1_i32, %c16_i32 : i32
    %12 = vector.broadcast %11 : i32 to vector<16x1xi32>
    %13 = arith.remsi %9, %12 : vector<16x1xi32>
    %c0_i32_4 = arith.constant 0 : i32
    %14 = vector.broadcast %c0_i32_4 : i32 to vector<16x1xi32>
    %15 = arith.cmpi ne, %13, %14 : vector<16x1xi32>
    %c0_i32_5 = arith.constant 0 : i32
    %16 = vector.broadcast %c0_i32_5 : i32 to vector<16x1xi32>
    %17 = arith.cmpi slt, %13, %16 : vector<16x1xi32>
    %c0_i32_6 = arith.constant 0 : i32
    %18 = arith.cmpi slt, %11, %c0_i32_6 : i32
    %19 = vector.broadcast %18 : i1 to vector<16x1xi1>
    %20 = vector.broadcast %19 : vector<16x1xi1> to vector<16x1xi1>
    %21 = arith.xori %17, %20 : vector<16x1xi1>
    %22 = arith.andi %21, %15 : vector<16x1xi1>
    %23 = vector.broadcast %11 : i32 to vector<16x1xi32>
    %24 = arith.addi %13, %23 : vector<16x1xi32>
    %25 = arith.select %22, %24, %13 : vector<16x1xi1>, vector<16x1xi32>
    %c2_i32 = arith.constant 2 : i32
    %26 = tpu.dynamic_rotate %8 by %c2_i32 dim 0 : vector<16x128xf32>, i32 -> vector<16x128xf32>
    %c-2_i32 = arith.constant -2 : i32
    %27 = vector.broadcast %c-2_i32 : i32 to vector<16x1xi32>
    %28 = arith.addi %25, %27 : vector<16x1xi32>
    %c0_i32_7 = arith.constant 0 : i32
    %29 = vector.broadcast %c0_i32_7 : i32 to vector<16x1xi32>
    %30 = arith.cmpi sge, %28, %29 : vector<16x1xi32>
    %c-2_i32_8 = arith.constant -2 : i32
    %31 = vector.broadcast %c-2_i32_8 : i32 to vector<16x1xi32>
    %32 = arith.addi %25, %31 : vector<16x1xi32>
    %c16_i32_9 = arith.constant 16 : i32
    %33 = vector.broadcast %c16_i32_9 : i32 to vector<16x1xi32>
    %34 = arith.cmpi slt, %32, %33 : vector<16x1xi32>
    %35 = arith.andi %30, %34 : vector<16x1xi1>
    %cst_10 = arith.constant 0.000000e+00 : f32
    %36 = vector.shape_cast %35 : vector<16x1xi1> to vector<16x1xi1>
    %37 = vector.broadcast %36 : vector<16x1xi1> to vector<16x128xi1>
    %38 = vector.broadcast %cst_10 : f32 to vector<16x128xf32>
    %39 = arith.select %37, %26, %38 : vector<16x128xi1>, vector<16x128xf32>
    %c14_i32 = arith.constant 14 : i32
    %40 = tpu.dynamic_rotate %8 by %c14_i32 dim 0 : vector<16x128xf32>, i32 -> vector<16x128xf32>
    %c2_i32_11 = arith.constant 2 : i32
    %41 = vector.broadcast %c2_i32_11 : i32 to vector<16x1xi32>
    %42 = arith.addi %25, %41 : vector<16x1xi32>
    %c0_i32_12 = arith.constant 0 : i32
    %43 = vector.broadcast %c0_i32_12 : i32 to vector<16x1xi32>
    %44 = arith.cmpi sge, %42, %43 : vector<16x1xi32>
    %c2_i32_13 = arith.constant 2 : i32
    %45 = vector.broadcast %c2_i32_13 : i32 to vector<16x1xi32>
    %46 = arith.addi %25, %45 : vector<16x1xi32>
    %c16_i32_14 = arith.constant 16 : i32
    %47 = vector.broadcast %c16_i32_14 : i32 to vector<16x1xi32>
    %48 = arith.cmpi slt, %46, %47 : vector<16x1xi32>
    %49 = arith.andi %44, %48 : vector<16x1xi1>
    %cst_15 = arith.constant 0.000000e+00 : f32
    %50 = vector.shape_cast %49 : vector<16x1xi1> to vector<16x1xi1>
    %51 = vector.broadcast %50 : vector<16x1xi1> to vector<16x128xi1>
    %52 = vector.broadcast %cst_15 : f32 to vector<16x128xf32>
    %53 = arith.select %51, %40, %52 : vector<16x128xi1>, vector<16x128xf32>
    %54 = tpu.concatenate %39, %8, %53 in 1 : vector<16x128xf32>, vector<16x128xf32>, vector<16x128xf32> -> vector<16x384xf32>
    %c0_16 = arith.constant 0 : index
    %c0_17 = arith.constant 0 : index
    %55 = vector.load %arg3[%c0_16, %c0_17] : memref<384x128xf32, #tpu.memory_space<vmem>>, vector<384x128xf32>
    %cst_18 = arith.constant dense<0.000000e+00> : vector<16x128xf32>
    %56 = tpu.matmul %54, %55, %cst_18 {dimension_numbers = #tpu.dot_dimension_numbers<[1], [0], [0], [1], [0, 0, 1, 1], [], []>} : vector<16x384xf32>, vector<384x128xf32>, vector<16x128xf32> -> vector<16x128xf32>
    %c0_19 = arith.constant 0 : index
    %c0_20 = arith.constant 0 : index
    %57 = vector.load %arg4[%c0_19, %c0_20] : memref<16x128xf32, #tpu.memory_space<vmem>>, vector<16x128xf32>
    tpu.vector_store %arg4[%c0_19, %c0_20], %56 {strides = array<i32>} : memref<16x128xf32, #tpu.memory_space<vmem>>, vector<16x128xf32>,
    return
  }
  func.func @transform_0(%arg0: i32) -> (i32, i32) {
    %c0_i32 = arith.constant 0 : i32
    %c0_i32_0 = arith.constant 0 : i32
    return %arg0, %c0_i32 : i32, i32
  }
  func.func @transform_1(%arg0: i32) -> (i32, i32) {
    %c0_i32 = arith.constant 0 : i32
    %c0_i32_0 = arith.constant 0 : i32
    %c0_i32_1 = arith.constant 0 : i32
    return %c0_i32, %c0_i32_0 : i32, i32
  }
  func.func @transform_2(%arg0: i32) -> (i32, i32) {
    %c0_i32 = arith.constant 0 : i32
    %c0_i32_0 = arith.constant 0 : i32
    %c0_i32_1 = arith.constant 0 : i32
    return %c0_i32, %c0_i32_0 : i32, i32
  }
  func.func @transform_3(%arg0: i32) -> (i32, i32) {
    %c0_i32 = arith.constant 0 : i32
    %c0_i32_0 = arith.constant 0 : i32
    return %arg0, %c0_i32 : i32, i32
  }
}

</mosaic_0001>

<llo_original>
// kernel: dilated_conv2d_block.1
$region0: #{dilated_conv2d_block.1}
  #allocation0 [shape = 'u32[]', space=smem, size = 0x4, offset = 0x4, fixed_abs, tag = 'smem constant byte address 0x4 - core index']
  #allocation1 [shape = 'u32[144,128]{1,0:T(1,128)}', space=vmem, size = 0x12000, scoped, tag = 'internal scratch']
  %s0 = inlined_call_operand.vmem [shape: f32[32,128], index: 0, kind: input, shape index: {}]
  %s1 = inlined_call_operand.vmem [shape: f32[2,128], index: 1, kind: input, shape index: {}]
  %s2 = inlined_call_operand.vmem [shape: f32[384,128], index: 2, kind: input, shape index: {}]
  %s3 = inlined_call_operand.vmem [shape: f32[32,128], index: 3, kind: output, shape index: {}]
  %s4 = sld [smem:[#allocation0]]
  $region45: #{dilated_conv2d_block.1} parent=0
    _
  %s6 = ssub.s32 1, %s4
  %s7 = scalar_select 0, %s6, %s4
  loop: start=0, step=1, limit=4
  $region2: #{dilated_conv2d_block.1} parent=0 // loop_pre_header
    _
  $region3: #{dilated_conv2d_block.1} parent=0 // loop_header
    %s9 = sphi 0, %s13
    %p10 = scmp.ge.s32.totalorder %s9, 4
    %s19 = sphi 0, %s21
    %s22 = sphi 0, %s19
    %s23 = sphi 0, %s22
    %s39 = sphi 0, %s23
    %s43 = sphi 0, %s43
    %s45 = sphi 0, %s43
    %s46 = sphi 0, %s45
    %s60 = sphi 0, %s46
    %s64 = sphi 0, %s64
    %s66 = sphi 0, %s64
    %s67 = sphi 0, %s66
    %s81 = sphi 0, %s67
    %s87 = sphi 0, %s89
    %s90 = sphi 0, %s87
    %s91 = sphi 0, %s90
    %s107 = sphi 0, %s91
  $region4: #{dilated_conv2d_block.1} parent=0 // loop_header_branch
    %12 = sbr.rel (%p10) target = $region8
  $region5: #{dilated_conv2d_block.1} parent=0 // loop_body
    %s14 = ssub.s32 %s9, 1
    %s15 = ssub.s32 %s9, 2
    %s16 = sadd.s32 %s9, 1
    %s17 = ssub.s32 %s9, %s16
    %p18 = scmp.eq.s32.totalorder %s17, 0
    %s20 = sadd.s32 %s19, 1
    %s21 = scalar_select %p18, %s19, %s20
    %p24 = pneg %p18
    %p25 = scmp.eq.s32.totalorder %s9, 1
    %p26 = por %p24, %p25
    %p27 = scmp.ne.s32.totalorder %s19, %s22
    %p28 = scmp.eq.s32.totalorder %s9, 0
    %p29 = por %p27, %p28
    %p30 = scmp.ne.s32.totalorder %s19, %s22
    %p31 = scmp.eq.s32.totalorder %s14, 1
    %p32 = por %p30, %p31
    %p33 = scmp.ne.s32.totalorder %s22, %s23
    %p34 = scmp.eq.s32.totalorder %s14, 0
    %p35 = por %p33, %p34
    %p36 = scmp.ne.s32.totalorder %s22, %s23
    %p37 = scmp.eq.s32.totalorder %s15, 1
    %p38 = por %p36, %p37
    %p40 = scmp.ne.s32.totalorder %s23, %s39
    %p41 = scmp.eq.s32.totalorder %s15, 0
    %p42 = por %p40, %p41
    %s44 = sadd.s32 %s43, 1
    %p47 = scmp.eq.s32.totalorder %s9, 1
    %p48 = scmp.ne.s32.totalorder %s43, %s45
    %p49 = scmp.eq.s32.totalorder %s9, 0
    %p50 = por %p48, %p49
    %p51 = scmp.ne.s32.totalorder %s43, %s45
    %p52 = scmp.eq.s32.totalorder %s14, 1
    %p53 = por %p51, %p52
    %p54 = scmp.ne.s32.totalorder %s45, %s46
    %p55 = scmp.eq.s32.totalorder %s14, 0
    %p56 = por %p54, %p55
    %p57 = scmp.ne.s32.totalorder %s45, %s46
    %p58 = scmp.eq.s32.totalorder %s15, 1
    %p59 = por %p57, %p58
    %p61 = scmp.ne.s32.totalorder %s46, %s60
    %p62 = scmp.eq.s32.totalorder %s15, 0
    %p63 = por %p61, %p62
    %s65 = sadd.s32 %s64, 1
    %p68 = scmp.eq.s32.totalorder %s9, 1
    %p69 = scmp.ne.s32.totalorder %s64, %s66
    %p70 = scmp.eq.s32.totalorder %s9, 0
    %p71 = por %p69, %p70
    %p72 = scmp.ne.s32.totalorder %s64, %s66
    %p73 = scmp.eq.s32.totalorder %s14, 1
    %p74 = por %p72, %p73
    %p75 = scmp.ne.s32.totalorder %s66, %s67
    %p76 = scmp.eq.s32.totalorder %s14, 0
    %p77 = por %p75, %p76
    %p78 = scmp.ne.s32.totalorder %s66, %s67
    %p79 = scmp.eq.s32.totalorder %s15, 1
    %p80 = por %p78, %p79
    %p82 = scmp.ne.s32.totalorder %s67, %s81
    %p83 = scmp.eq.s32.totalorder %s15, 0
    %p84 = por %p82, %p83
    %s85 = ssub.s32 %s9, %s16
    %p86 = scmp.eq.s32.totalorder %s85, 0
    %s88 = sadd.s32 %s87, 1
    %s89 = scalar_select %p86, %s87, %s88
    %p92 = pneg %p86
    %p93 = scmp.eq.s32.totalorder %s9, 1
    %p94 = por %p92, %p93
    %p95 = scmp.ne.s32.totalorder %s87, %s90
    %p96 = scmp.eq.s32.totalorder %s9, 0
    %p97 = por %p95, %p96
    %p98 = scmp.ne.s32.totalorder %s87, %s90
    %p99 = scmp.eq.s32.totalorder %s14, 1
    %p100 = por %p98, %p99
    %p101 = scmp.ne.s32.totalorder %s90, %s91
    %p102 = scmp.eq.s32.totalorder %s14, 0
    %p103 = por %p101, %p102
    %p104 = scmp.ne.s32.totalorder %s90, %s91
    %p105 = scmp.eq.s32.totalorder %s15, 1
    %p106 = por %p104, %p105
    %p108 = scmp.ne.s32.totalorder %s91, %s107
    %p109 = scmp.eq.s32.totalorder %s15, 0
    %p110 = por %p108, %p109
    %p111 = scmp.le.s32.totalorder 1, %s9
    %p112 = scmp.lt.s32.totalorder %s9, 3
    %p113 = pnand %p111, %p112
    %p114 = pneg %p113
    // Predicated region
    $region9: #{dilated_conv2d_block.1} parent=5 // pred_check
      _
    $region10: #{dilated_conv2d_block.1} parent=5 // pred_check_branch
      %116 = sbr.rel (%p113) target = $region12
    $region11: #{dilated_conv2d_block.1} parent=5 // pred_region
      %s117 = ssub.s32 %s9, 1
      // Predicated region
      $region13: #{dilated_conv2d_block.1} parent=11 // pred_check
        %p118 = pneg %p56
      $region14: #{dilated_conv2d_block.1} parent=11 // pred_check_branch
        %120 = sbr.rel (%p118) target = $region16
      $region15: #{dilated_conv2d_block.1} parent=11 // pred_region
        _
      $region16: #{dilated_conv2d_block.1} parent=11 // pred_fallthru
        _
      // Predicated region
      $region17: #{dilated_conv2d_block.1} parent=11 // pred_check
        %p121 = pneg %p77
      $region18: #{dilated_conv2d_block.1} parent=11 // pred_check_branch
        %123 = sbr.rel (%p121) target = $region20
      $region19: #{dilated_conv2d_block.1} parent=11 // pred_region
        _
      $region20: #{dilated_conv2d_block.1} parent=11 // pred_fallthru
        _
    $region12: #{dilated_conv2d_block.1} parent=5 // pred_fallthru
      _
    %p124 = scmp.lt.s32.totalorder %s9, 2
    // Predicated region
    $region21: #{dilated_conv2d_block.1} parent=5 // pred_check
      %p125 = pneg %p124
    $region22: #{dilated_conv2d_block.1} parent=5 // pred_check_branch
      %127 = sbr.rel (%p125) target = $region24
    $region23: #{dilated_conv2d_block.1} parent=5 // pred_region
      // Predicated region
      $region25: #{dilated_conv2d_block.1} parent=23 // pred_check
        %p128 = pneg %p29
      $region26: #{dilated_conv2d_block.1} parent=23 // pred_check_branch
        %130 = sbr.rel (%p128) target = $region28
      $region27: #{dilated_conv2d_block.1} parent=23 // pred_region
        %s131 = smul.u32 2, %s9
        %p132 = scmp.lt.s32.totalorder %s131, 3
        %s133 = scalar_select %p132, %s131, 3
        %s134 = smul.addr %s133, 8
        %s135 = scalar_lea.vmem %s0, %s134
        %s136 = smul.u32 2, %s9
      $region28: #{dilated_conv2d_block.1} parent=23 // pred_fallthru
        _
    $region24: #{dilated_conv2d_block.1} parent=5 // pred_fallthru
      _
    %p137 = scmp.le.s32.totalorder 1, %s9
    %p138 = scmp.lt.s32.totalorder %s9, 3
    %p139 = pnand %p137, %p138
    %p140 = pneg %p139
    // Predicated region
    $region29: #{dilated_conv2d_block.1} parent=5 // pred_check
      _
    $region30: #{dilated_conv2d_block.1} parent=5 // pred_check_branch
      %142 = sbr.rel (%p139) target = $region32
    $region31: #{dilated_conv2d_block.1} parent=5 // pred_region
      %s143 = ssub.s32 %s9, 1
      %s144 = smul.u32 2, %s14
      %p145 = scmp.lt.s32.totalorder %s144, 3
      %s146 = scalar_select %p145, %s144, 3
      %s147 = smul.addr %s146, 8
      %s148 = scalar_lea.vmem %s0, %s147
      %p149 = pneg %p35
      %p150 = pneg %p32
      %p151 = pneg %p56
      %p152 = pneg %p53
      %p153 = pneg %p77
      %p154 = pneg %p74
      %p155 = pneg %p103
      %p156 = pneg %p100
      %s157 = smul.u32 2, %s14
      %p158 = scmp.lt.s32.totalorder %s157, 3
      %s159 = scalar_select %p158, %s157, 3
      %s160 = smul.addr %s159, 8
      %s161 = scalar_lea.vmem %s3, %s160
      %s162 = smul.u32 2, %s14
      %p163 = scmp.lt.s32.totalorder %s162, 3
      %s164 = scalar_select %p163, %s162, 3
      %s165 = smul.addr %s164, 8
      %s166 = scalar_lea.vmem %s0, %s165
      %s167 = smul.u32 2, %s14
      %s168 = smul.u32 2, %s14
      %p169 = scmp.lt.s32.totalorder %s168, 3
      %s170 = scalar_select %p169, %s168, 3
      %s171 = smul.addr %s170, 8
      %s172 = scalar_lea.vmem %s3, %s171
      %s173 = smul.u32 2, %s14
      %v174 = vld [vmem:[%s166] sm:$0xff]
      %v175 = vld [vmem:[%s166 + $0x8] sm:$0xff]
      %v176 = vld [vmem:[%s1] sm:$0x1]
      %v177 = vlaneseq
      %v178 = vshrl.u32 %v177, 7
      %v179 = vsub.s32 0, %v178
      %v180 = vrot.slane %v176, %v179
      %v181 = vmul.f32 %v174, %v180
      %v182 = vmul.f32 %v175, %v180
      %v183 = vld [vmem:[%s1 + $0x1] sm:$0x1]
      %v184 = vlaneseq
      %v185 = vshrl.u32 %v184, 7
      %v186 = vsub.s32 0, %v185
      %v187 = vrot.slane %v183, %v186
      %v188 = vadd.f32 %v181, %v187
      %v189 = vadd.f32 %v182, %v187
      %v190 = vmax.f32 %v188, 0.0
      %v191 = vmax.f32 %v189, 0.0
      %v192 = vlaneseq
      %v193 = vshrl.u32 %v192, 7
      %v194 = vadd.s32 %v193, 8
      %vm195 = vcmp.lt.s32.totalorder %v193, 0
      %v196 = vsub.s32 0, %v193
      %v197 = vsel %vm195, %v196, %v193
      %v198 = vshrl.u32 %v197, 4
      %v199 = vand.u32 %v197, 15
      %v200 = vsub.s32 0, %v199
      %v201 = vsel %vm195, %v200, %v199
      %vm202 = vcmp.lt.s32.totalorder %v194, 0
      %v203 = vsub.s32 0, %v194
      %v204 = vsel %vm202, %v203, %v194
      %v205 = vshrl.u32 %v204, 4
      %v206 = vand.u32 %v204, 15
      %v207 = vsub.s32 0, %v206
      %v208 = vsel %vm202, %v207, %v206
      %vm209 = vcmp.ne.s32.totalorder %v201, 0
      %vm210 = vcmp.ne.s32.totalorder %v208, 0
      %vm211 = vcmp.lt.s32.totalorder %v201, 0
      %vm212 = vcmp.lt.s32.totalorder %v208, 0
      %vm213 = vmand %vm211, %vm209
      %vm214 = vmand %vm212, %vm210
      %v215 = vadd.s32 %v201, 16
      %v216 = vadd.s32 %v208, 16
      %v217 = vsel %vm213, %v215, %v201
      %v218 = vsel %vm214, %v216, %v208
      %v219 = vrot.slane %v190, 6
      %v220 = vrot.slane %v191, 6
      %vm221 = vcmp.lt.s32.totalorder %v193, 2
      %v222 = vsel %vm221, %v219, %v220
      %v223 = vsel %vm221, %v220, %v219
      %v224 = vadd.s32 %v217, 4294967294
      %v225 = vadd.s32 %v218, 4294967294
      %vm226 = vcmp.ge.s32.totalorder %v224, 0
      %vm227 = vcmp.ge.s32.totalorder %v225, 0
      %vm228 = vcmp.lt.s32.totalorder %v224, 16
      %vm229 = vcmp.lt.s32.totalorder %v225, 16
      %vm230 = vmand %vm226, %vm228
      %vm231 = vmand %vm227, %vm229
      %v232 = vsel %vm230, 1, 0
      %v233 = vsel %vm231, 1, 0
      %vm234 = vcmp.eq.s32.totalorder %v232, 1
      %vm235 = vcmp.eq.s32.totalorder %v233, 1
      %v236 = vsel %vm234, %v223, 0.0
      %v237 = vsel %vm235, %v222, 0.0
      %v238 = vrot.slane %v190, 2
      %v239 = vrot.slane %v191, 2
      %vm240 = vcmp.lt.s32.totalorder %v193, 6
      %v241 = vsel %vm240, %v238, %v239
      %v242 = vsel %vm240, %v239, %v238
      %v243 = vadd.s32 %v217, 2
      %v244 = vadd.s32 %v218, 2
      %vm245 = vcmp.ge.s32.totalorder %v243, 0
      %vm246 = vcmp.ge.s32.totalorder %v244, 0
      %vm247 = vcmp.lt.s32.totalorder %v243, 16
      %vm248 = vcmp.lt.s32.totalorder %v244, 16
      %vm249 = vmand %vm245, %vm247
      %vm250 = vmand %vm246, %vm248
      %v251 = vsel %vm249, 1, 0
      %v252 = vsel %vm250, 1, 0
      %vm253 = vcmp.eq.s32.totalorder %v251, 1
      %vm254 = vcmp.eq.s32.totalorder %v252, 1
      %v255 = vsel %vm253, %v241, 0.0
      %v256 = vsel %vm254, %v242, 0.0
      %v257 = vld [vmem:[%s2] sm:$0xff]
      %v258 = vld [vmem:[%s2 + $0x8] sm:$0xff]
      %v259 = vld [vmem:[%s2 + $0x10] sm:$0xff]
      %v260 = vld [vmem:[%s2 + $0x18] sm:$0xff]
      %v261 = vld [vmem:[%s2 + $0x20] sm:$0xff]
      %v262 = vld [vmem:[%s2 + $0x28] sm:$0xff]
      %v263 = vld [vmem:[%s2 + $0x30] sm:$0xff]
      %v264 = vld [vmem:[%s2 + $0x38] sm:$0xff]
      %v265 = vld [vmem:[%s2 + $0x40] sm:$0xff]
      %v266 = vld [vmem:[%s2 + $0x48] sm:$0xff]
      %v267 = vld [vmem:[%s2 + $0x50] sm:$0xff]
      %v268 = vld [vmem:[%s2 + $0x58] sm:$0xff]
      %v269 = vld [vmem:[%s2 + $0x60] sm:$0xff]
      %v270 = vld [vmem:[%s2 + $0x68] sm:$0xff]
      %v271 = vld [vmem:[%s2 + $0x70] sm:$0xff]
      %v272 = vld [vmem:[%s2 + $0x78] sm:$0xff]
      %v273 = vld [vmem:[%s2 + $0x80] sm:$0xff]
      %v274 = vld [vmem:[%s2 + $0x88] sm:$0xff]
      %v275 = vld [vmem:[%s2 + $0x90] sm:$0xff]
      %v276 = vld [vmem:[%s2 + $0x98] sm:$0xff]
      %v277 = vld [vmem:[%s2 + $0xa0] sm:$0xff]
      %v278 = vld [vmem:[%s2 + $0xa8] sm:$0xff]
      %v279 = vld [vmem:[%s2 + $0xb0] sm:$0xff]
      %v280 = vld [vmem:[%s2 + $0xb8] sm:$0xff]
      %v281 = vld [vmem:[%s2 + $0xc0] sm:$0xff]
      %v282 = vld [vmem:[%s2 + $0xc8] sm:$0xff]
      %v283 = vld [vmem:[%s2 + $0xd0] sm:$0xff]
      %v284 = vld [vmem:[%s2 + $0xd8] sm:$0xff]
      %v285 = vld [vmem:[%s2 + $0xe0] sm:$0xff]
      %v286 = vld [vmem:[%s2 + $0xe8] sm:$0xff]
      %v287 = vld [vmem:[%s2 + $0xf0] sm:$0xff]
      %v288 = vld [vmem:[%s2 + $0xf8] sm:$0xff]
      %v289 = vld [vmem:[%s2 + $0x100] sm:$0xff]
      %v290 = vld [vmem:[%s2 + $0x108] sm:$0xff]
      %v291 = vld [vmem:[%s2 + $0x110] sm:$0xff]
      %v292 = vld [vmem:[%s2 + $0x118] sm:$0xff]
      %v293 = vld [vmem:[%s2 + $0x120] sm:$0xff]
      %v294 = vld [vmem:[%s2 + $0x128] sm:$0xff]
      %v295 = vld [vmem:[%s2 + $0x130] sm:$0xff]
      %v296 = vld [vmem:[%s2 + $0x138] sm:$0xff]
      %v297 = vld [vmem:[%s2 + $0x140] sm:$0xff]
      %v298 = vld [vmem:[%s2 + $0x148] sm:$0xff]
      %v299 = vld [vmem:[%s2 + $0x150] sm:$0xff]
      %v300 = vld [vmem:[%s2 + $0x158] sm:$0xff]
      %v301 = vld [vmem:[%s2 + $0x160] sm:$0xff]
      %v302 = vld [vmem:[%s2 + $0x168] sm:$0xff]
      %v303 = vld [vmem:[%s2 + $0x170] sm:$0xff]
      %v304 = vld [vmem:[%s2 + $0x178] sm:$0xff]
      %305 = vmatprep.subr.mxu0 0.0
      %306 = vmatpush1.msra.mxu0 %v257
      %307 = vmatprep.subr.mxu0 0.0
      %308 = vmatpush1.msra.mxu0 %v258
      %309 = vmatprep.subr.mxu0 0.0
      %310 = vmatpush1.msra.mxu0 %v259
      %311 = vmatprep.subr.mxu0 0.0
      %312 = vmatpush1.msra.mxu0 %v260
      %313 = vmatprep.subr.mxu0 0.0
      %314 = vmatpush1.msra.mxu0 %v261
      %315 = vmatprep.subr.mxu0 0.0
      %316 = vmatpush1.msra.mxu0 %v262
      %317 = vmatprep.subr.mxu0 0.0
      %318 = vmatpush1.msra.mxu0 %v263
      %319 = vmatprep.subr.mxu0 0.0
      %320 = vmatpush1.msra.mxu0 %v264
      %321 = vmatprep.subr.mxu0 0.0
      %322 = vmatpush1.msra.mxu0 %v265
      %323 = vmatprep.subr.mxu0 0.0
      %324 = vmatpush1.msra.mxu0 %v266
      %325 = vmatprep.subr.mxu0 0.0
      %326 = vmatpush1.msra.mxu0 %v267
      %327 = vmatprep.subr.mxu0 0.0
      %328 = vmatpush1.msra.mxu0 %v268
      %329 = vmatprep.subr.mxu0 0.0
      %330 = vmatpush1.msra.mxu0 %v269
      %331 = vmatprep.subr.mxu0 0.0
      %332 = vmatpush1.msra.mxu0 %v270
      %333 = vmatprep.subr.mxu0 0.0
      %334 = vmatpush1.msra.mxu0 %v271
      %335 = vmatprep.subr.mxu0 0.0
      %336 = vmatpush1.msra.mxu0 %v272
      %337 = vmatprep.subr.mxu0 0.0
      %338 = vmatpush1.msra.mxu0 %v273
      %339 = vmatprep.subr.mxu0 0.0
      %340 = vmatpush1.msra.mxu0 %v274
      %341 = vmatprep.subr.mxu0 0.0
      %342 = vmatpush1.msra.mxu0 %v275
      %343 = vmatprep.subr.mxu0 0.0
      %344 = vmatpush1.msra.mxu0 %v276
      %345 = vmatprep.subr.mxu0 0.0
      %346 = vmatpush1.msra.mxu0 %v277
      %347 = vmatprep.subr.mxu0 0.0
      %348 = vmatpush1.msra.mxu0 %v278
      %349 = vmatprep.subr.mxu0 0.0
      %350 = vmatpush1.msra.mxu0 %v279
      %351 = vmatprep.subr.mxu0 0.0
      %352 = vmatpush1.msra.mxu0 %v280
      %353 = vmatprep.subr.mxu0 0.0
      %354 = vmatpush1.msra.mxu0 %v281
      %355 = vmatprep.subr.mxu0 0.0
      %356 = vmatpush1.msra.mxu0 %v282
      %357 = vmatprep.subr.mxu0 0.0
      %358 = vmatpush1.msra.mxu0 %v283
      %359 = vmatprep.subr.mxu0 0.0
      %360 = vmatpush1.msra.mxu0 %v284
      %361 = vmatprep.subr.mxu0 0.0
      %362 = vmatpush1.msra.mxu0 %v285
      %363 = vmatprep.subr.mxu0 0.0
      %364 = vmatpush1.msra.mxu0 %v286
      %365 = vmatprep.subr.mxu0 0.0
      %366 = vmatpush1.msra.mxu0 %v287
      %367 = vmatprep.subr.mxu0 0.0
      %368 = vmatpush1.msra.mxu0 %v288
      %369 = vmatprep.mubr.f32.mxu0 %v190
      %370 = vmatmul.mubr.f32.gmra.mrb[0].mxu0 %v236
      %v371 = vpop.f32.mrb[0].mxu0
      %v372 = vadd.f32 0.0, %v371
      %v373 = vpop.f32.mrb[0].mxu0
      %374 = vmatprep.mubr.f32.mxu0 %v191
      %375 = vmatmul.mubr.f32.gmra.mrb[0].mxu0 %v237
      %v376 = vpop.f32.mrb[0].mxu0
      %v377 = vadd.f32 0.0, %v376
      %v378 = vpop.f32.mrb[0].mxu0
      %379 = vdwg.mxu0
      %380 = vmatprep.subr.mxu0 0.0
      %381 = vmatpush1.msra.mxu0 %v289
      %382 = vmatprep.subr.mxu0 0.0
      %383 = vmatpush1.msra.mxu0 %v290
      %384 = vmatprep.subr.mxu0 0.0
      %385 = vmatpush1.msra.mxu0 %v291
      %386 = vmatprep.subr.mxu0 0.0
      %387 = vmatpush1.msra.mxu0 %v292
      %388 = vmatprep.subr.mxu0 0.0
      %389 = vmatpush1.msra.mxu0 %v293
      %390 = vmatprep.subr.mxu0 0.0
      %391 = vmatpush1.msra.mxu0 %v294
      %392 = vmatprep.subr.mxu0 0.0
      %393 = vmatpush1.msra.mxu0 %v295
      %394 = vmatprep.subr.mxu0 0.0
      %395 = vmatpush1.msra.mxu0 %v296
      %396 = vmatprep.subr.mxu0 0.0
      %397 = vmatpush1.msra.mxu0 %v297
      %398 = vmatprep.subr.mxu0 0.0
      %399 = vmatpush1.msra.mxu0 %v298
      %400 = vmatprep.subr.mxu0 0.0
      %401 = vmatpush1.msra.mxu0 %v299
      %402 = vmatprep.subr.mxu0 0.0
      %403 = vmatpush1.msra.mxu0 %v300
      %404 = vmatprep.subr.mxu0 0.0
      %405 = vmatpush1.msra.mxu0 %v301
      %406 = vmatprep.subr.mxu0 0.0
      %407 = vmatpush1.msra.mxu0 %v302
      %408 = vmatprep.subr.mxu0 0.0
      %409 = vmatpush1.msra.mxu0 %v303
      %410 = vmatprep.subr.mxu0 0.0
      %411 = vmatpush1.msra.mxu0 %v304
      %412 = vmatprep.subr.mxu0 0.0
      %413 = vmatpush1.msra.mxu0 0.0
      %414 = vmatprep.subr.mxu0 0.0
      %415 = vmatpush1.msra.mxu0 0.0
      %416 = vmatprep.subr.mxu0 0.0
      %417 = vmatpush1.msra.mxu0 0.0
      %418 = vmatprep.subr.mxu0 0.0
      %419 = vmatpush1.msra.mxu0 0.0
      %420 = vmatprep.subr.mxu0 0.0
      %421 = vmatpush1.msra.mxu0 0.0
      %422 = vmatprep.subr.mxu0 0.0
      %423 = vmatpush1.msra.mxu0 0.0
      %424 = vmatprep.subr.mxu0 0.0
      %425 = vmatpush1.msra.mxu0 0.0
      %426 = vmatprep.subr.mxu0 0.0
      %427 = vmatpush1.msra.mxu0 0.0
      %428 = vmatprep.subr.mxu0 0.0
      %429 = vmatpush1.msra.mxu0 0.0
      %430 = vmatprep.subr.mxu0 0.0
      %431 = vmatpush1.msra.mxu0 0.0
      %432 = vmatprep.subr.mxu0 0.0
      %433 = vmatpush1.msra.mxu0 0.0
      %434 = vmatprep.subr.mxu0 0.0
      %435 = vmatpush1.msra.mxu0 0.0
      %436 = vmatprep.subr.mxu0 0.0
      %437 = vmatpush1.msra.mxu0 0.0
      %438 = vmatprep.subr.mxu0 0.0
      %439 = vmatpush1.msra.mxu0 0.0
      %440 = vmatprep.subr.mxu0 0.0
      %441 = vmatpush1.msra.mxu0 0.0
      %442 = vmatprep.subr.mxu0 0.0
      %443 = vmatpush1.msra.mxu0 0.0
      %444 = vmatprep.mubr.f32.mxu0 0.0
      %445 = vmatmul.mubr.f32.gmra.mrb[0].mxu0 %v255
      %v446 = vpop.f32.mrb[0].mxu0
      %v447 = vadd.f32 %v372, %v446
      %v448 = vpop.f32.mrb[0].mxu0
      %449 = vmatprep.mubr.f32.mxu0 0.0
      %450 = vmatmul.mubr.f32.gmra.mrb[0].mxu0 %v256
      %v451 = vpop.f32.mrb[0].mxu0
      %v452 = vadd.f32 %v377, %v451
      %v453 = vpop.f32.mrb[0].mxu0
      %454 = vdwg.mxu0
      %455 = vst [vmem:[%s172] sm:$0xff] %v447
      %456 = vst [vmem:[%s172 + $0x8] sm:$0xff] %v452
      %s457 = smul.u32 2, %s14
      %p458 = scmp.lt.s32.totalorder %s457, 3
      %s459 = scalar_select %p458, %s457, 3
      %s460 = smul.addr %s459, 8
      %s461 = scalar_lea.vmem %s3, %s460
      // Predicated region
      $region33: #{dilated_conv2d_block.1} parent=31 // pred_check
        %p462 = pneg %p100
      $region34: #{dilated_conv2d_block.1} parent=31 // pred_check_branch
        %464 = sbr.rel (%p462) target = $region36
      $region35: #{dilated_conv2d_block.1} parent=31 // pred_region
        %s465 = smul.u32 2, %s14
      $region36: #{dilated_conv2d_block.1} parent=31 // pred_fallthru
        _
    $region32: #{dilated_conv2d_block.1} parent=5 // pred_fallthru
      _
    %p466 = scmp.le.s32.totalorder 2, %s9
    // Predicated region
    $region37: #{dilated_conv2d_block.1} parent=5 // pred_check
      %p467 = pneg %p466
    $region38: #{dilated_conv2d_block.1} parent=5 // pred_check_branch
      %469 = sbr.rel (%p467) target = $region40
    $region39: #{dilated_conv2d_block.1} parent=5 // pred_region
      %s470 = ssub.s32 %s9, 2
      // Predicated region
      $region41: #{dilated_conv2d_block.1} parent=39 // pred_check
        %p471 = pneg %p106
      $region42: #{dilated_conv2d_block.1} parent=39 // pred_check_branch
        %473 = sbr.rel (%p471) target = $region44
      $region43: #{dilated_conv2d_block.1} parent=39 // pred_region
        %s474 = smul.u32 2, %s15
        %p475 = scmp.lt.s32.totalorder %s474, 3
        %s476 = scalar_select %p475, %s474, 3
        %s477 = smul.addr %s476, 8
        %s478 = scalar_lea.vmem %s3, %s477
      $region44: #{dilated_conv2d_block.1} parent=39 // pred_fallthru
        _
    $region40: #{dilated_conv2d_block.1} parent=5 // pred_fallthru
      _
  $region6: #{dilated_conv2d_block.1} parent=0 // loop_footer
    %s13 = sadd.s32 1, %s9
  $region7: #{dilated_conv2d_block.1} parent=0 // loop_footer_branch
    %8 = sbr.rel target = $region3
  $region8: #{dilated_conv2d_block.1} parent=0 // loop_exit
    _

</llo_original>
